<compile_context>
chip_gen: v5e
topology: v5e:2x2
jax: 0.10.0
libtpu: 0.0.40
codegen_flags: <defaults>
</compile_context>

<pallas_src>
import functools

import jax
import jax.numpy as jnp
from jax import lax
from jax.experimental import pallas as pl
from jax.experimental.pallas import tpu as pltpu

EPS = 1e-5  # PyTorch BatchNorm1d default eps


def small_mlp_kernel(x_ref, w1t_ref, b1_ref, w2t_ref, b2_ref, w3r_ref, b3_ref, o_ref):
    # fc1 (transposed chain): (H1, D) . (TB, D)^T -> (H1, TB); bias (H1, 1) lane-broadcasts.
    h = lax.dot_general(
        w1t_ref[...], x_ref[...],
        dimension_numbers=(((1,), (1,)), ((), ())),
        preferred_element_type=jnp.float32) + b1_ref[...]
    h = jnp.maximum(h, 0.0)

    # fc2 with BN1 folded in, + ReLU.          (dropout1: identity in eval mode)
    h = jnp.dot(w2t_ref[...], h.astype(w2t_ref.dtype),
                preferred_element_type=jnp.float32) + b2_ref[...]
    h = jnp.maximum(h, 0.0)

    # fc3 with BN2 folded in.                   (dropout2: identity in eval mode)
    # (1, H2) @ (H2, TB) -> lane-dense (1, TB) store; fc3 bias is an SMEM scalar.
    o_ref[...] = jnp.dot(w3r_ref[...], h.astype(w3r_ref.dtype),
                         preferred_element_type=jnp.float32) + b3_ref[0, 0]


def _fold_bn_into_next_linear(w_next, b_next, gamma, beta, mean, var, eps=EPS):
    """BN(h) = s*h + c with s = gamma*rsqrt(var+eps), c = beta - mean*s.
    Then BN(h) @ W + b == h @ (s^T * W) + (b + c @ W)."""
    s = gamma / jnp.sqrt(var + eps)          # (1, H)
    c = beta - mean * s                      # (1, H)
    w_folded = s.reshape(-1, 1) * w_next     # (H, H_next)
    b_folded = b_next + c @ w_next           # (1, H_next)
    return w_folded, b_folded


def _choose_tile(B, max_tile):
    """Rows of x per grid step.  Multiple of 128 (lane-dense (1, TB) output blocks), capped
    so the grid has >= 2 steps when B >= 256 (v7x megacore sharding of the batch axis)."""
    if B <= 128:
        return B                                   # single full block (block dims == array dims)
    tb = max(128, (min(max_tile, B) // 128) * 128)
    if B >= 256:
        tb = min(tb, max(128, (pl.cdiv(B, 2) // 128) * 128))
    return tb


@functools.partial(jax.jit, static_argnames=("max_tile",))
def small_mlp_forward(x, params, *, max_tile=4096):
    """Eval-mode SmallMLP forward.  Pass bf16 `x` to use the bf16 MXU path (f32 accumulate,
    looser tolerance because BN scales are baked into the folded weights before the cast)."""
    if x.dtype not in (jnp.bfloat16, jnp.float32):
        x = x.astype(jnp.float32)
    compute_dtype = x.dtype
    B, D = x.shape
    H1 = params["w1"].shape[1]
    H2 = params["w2"].shape[1]

    # Fold eval-mode BatchNorm into the following Linear layers (tiny wrapper-side precompute).
    w2f, b2f = _fold_bn_into_next_linear(
        params["w2"], params["b2"],
        params["g1"], params["be1"], params["m1"], params["v1"])
    w3f, b3f = _fold_bn_into_next_linear(
        params["w3"], params["b3"],
        params["g2"], params["be2"], params["m2"], params["v2"])

    # Transposed-chain layout: weights as (out, in), biases as column vectors; biases stay f32.
    w1t = params["w1"].T.astype(compute_dtype)             # (H1, D)
    b1c = params["b1"].reshape(H1, 1).astype(jnp.float32)  # (H1, 1)
    w2t = w2f.T.astype(compute_dtype)                      # (H2, H1)
    b2c = b2f.reshape(H2, 1).astype(jnp.float32)           # (H2, 1)
    w3r = w3f.T.astype(compute_dtype)                      # (1, H2)
    b3s = b3f.reshape(1, 1).astype(jnp.float32)            # (1, 1) scalar -> SMEM

    TB = _choose_tile(B, max_tile)
    grid = (pl.cdiv(B, TB),)

    dsize = jnp.dtype(compute_dtype).itemsize
    cost = pl.CostEstimate(
        flops=2 * B * (D * H1 + H1 * H2 + H2),
        transcendentals=0,
        bytes_accessed=(B * D * dsize + B * 4
                        + (D * H1 + H1 * H2 + H2) * dsize
                        + (H1 + H2 + 1) * 4),
    )

    out = pl.pallas_call(
        small_mlp_kernel,
        out_shape=jax.ShapeDtypeStruct((1, B), jnp.float32),
        grid=grid,
        in_specs=[
            pl.BlockSpec((TB, D), lambda i: (i, 0)),    # x: batch-tiled, double-buffered
            pl.BlockSpec((H1, D), lambda i: (0, 0)),    # weights / biases: VMEM-resident
            pl.BlockSpec((H1, 1), lambda i: (0, 0)),
            pl.BlockSpec((H2, H1), lambda i: (0, 0)),
            pl.BlockSpec((H2, 1), lambda i: (0, 0)),
            pl.BlockSpec((1, H2), lambda i: (0, 0)),
            pl.BlockSpec(memory_space=pltpu.MemorySpace.SMEM),  # fc3 bias scalar
        ],
        out_specs=pl.BlockSpec((1, TB), lambda i: (0, i)),      # lane-dense (1, TB) tiles
        compiler_params=pltpu.CompilerParams(
            dimension_semantics=("parallel",),
            vmem_limit_bytes=32 * 1024 * 1024),
        cost_estimate=cost,
    )(x, w1t, b1c, w2t, b2c, w3r, b3s)

    return out[0]   # == x.squeeze(-1) in the PyTorch module


def init_params(key, input_dim, hidden_dim1=64, hidden_dim2=32):
    ks = jax.random.split(key, 14)
    scale = 0.05
    return {
        # Linear weights stored (in, out)
        "w1": scale * jax.random.normal(ks[0], (input_dim, hidden_dim1), jnp.float32),
        "b1": scale * jax.random.normal(ks[1], (1, hidden_dim1), jnp.float32),
        "w2": scale * jax.random.normal(ks[2], (hidden_dim1, hidden_dim2), jnp.float32),
        "b2": scale * jax.random.normal(ks[3], (1, hidden_dim2), jnp.float32),
        "w3": scale * jax.random.normal(ks[4], (hidden_dim2, 1), jnp.float32),
        "b3": scale * jax.random.normal(ks[5], (1, 1), jnp.float32),
        # Non-trivial BN stats so the BN-folding path is actually exercised
        "g1": 1.0 + 0.1 * jax.random.normal(ks[6], (1, hidden_dim1), jnp.float32),
        "be1": 0.1 * jax.random.normal(ks[7], (1, hidden_dim1), jnp.float32),
        "m1": 0.1 * jax.random.normal(ks[8], (1, hidden_dim1), jnp.float32),
        "v1": jax.random.uniform(ks[9], (1, hidden_dim1), jnp.float32, 0.5, 1.5),
        "g2": 1.0 + 0.1 * jax.random.normal(ks[10], (1, hidden_dim2), jnp.float32),
        "be2": 0.1 * jax.random.normal(ks[11], (1, hidden_dim2), jnp.float32),
        "m2": 0.1 * jax.random.normal(ks[12], (1, hidden_dim2), jnp.float32),
        "v2": jax.random.uniform(ks[13], (1, hidden_dim2), jnp.float32, 0.5, 1.5),
    }


def reference_forward(x, params):
    """Pure-JAX reference with PyTorch eval-mode semantics (BN unfolded)."""
    h = jnp.maximum(x @ params["w1"] + params["b1"], 0.0)
    h = (h - params["m1"]) * (params["g1"] / jnp.sqrt(params["v1"] + EPS)) + params["be1"]
    h = jnp.maximum(h @ params["w2"] + params["b2"], 0.0)
    h = (h - params["m2"]) * (params["g2"] / jnp.sqrt(params["v2"] + EPS)) + params["be2"]
    return (h @ params["w3"] + params["b3"])[:, 0]


if __name__ == "__main__":
    key = jax.random.PRNGKey(0)
    kx, kp = jax.random.split(key)

    B, INPUT_DIM = 8, 16
    params = init_params(kp, INPUT_DIM)

    # Small batch: single full block (grid of 1), exact f32 semantics.
    x = jax.random.normal(kx, (B, INPUT_DIM), jnp.float32)
    ref = reference_forward(x, params)
    out = jax.block_until_ready(small_mlp_forward(x, params))
    assert out.shape == (B,), out.shape
    assert jnp.allclose(out, ref, atol=1e-4, rtol=1e-4), (out, ref)

    # Larger batch not a multiple of 128: multi-step grid + clipped partial tail tile.
    B2 = 1000
    x2 = jax.random.normal(kx, (B2, INPUT_DIM), jnp.float32)
    ref2 = reference_forward(x2, params)
    out2 = jax.block_until_ready(small_mlp_forward(x2, params))
    assert out2.shape == (B2,), out2.shape
    assert jnp.allclose(out2, ref2, atol=1e-4, rtol=1e-4), (out2, ref2)

    # bf16 x supplied by the caller (bf16 MXU inputs, f32 accumulation): looser tolerance
    # because BN scales are baked into the folded weights before the bf16 cast.
    out2_bf16 = jax.block_until_ready(small_mlp_forward(x2.astype(jnp.bfloat16), params))
    assert out2_bf16.shape == (B2,), out2_bf16.shape
    assert jnp.allclose(out2_bf16, ref2, atol=5e-2, rtol=5e-2), (out2_bf16, ref2)

    print("KERNEL_OK")
</pallas_src>

<mosaic_0001>
module attributes {stable_mosaic.version = 11 : i64} {
  func.func @small_mlp_kernel(%arg0: i32, %arg1: memref<8x16xf32, #tpu.memory_space<vmem>>, %arg2: memref<64x16xf32, #tpu.memory_space<vmem>>, %arg3: memref<64x1xf32, #tpu.memory_space<vmem>>, %arg4: memref<32x64xf32, #tpu.memory_space<vmem>>, %arg5: memref<32x1xf32, #tpu.memory_space<vmem>>, %arg6: memref<1x32xf32, #tpu.memory_space<vmem>>, %arg7: memref<1x1xf32, #tpu.memory_space<smem>>, %arg8: memref<1x8xf32, #tpu.memory_space<vmem>>) attributes {dimension_semantics = [#tpu.dimension_semantics<parallel>], iteration_bounds = array<i64: 1>, scalar_prefetch = 0 : i64, scratch_operands = 0 : i64, tpu.core_type = #tpu.core_type<tc>, window_params = [{transform_indices = @transform_0, window_bounds = array<i64: 8, 16>}, {pipeline_mode = #tpu.pipeline_mode<synchronous>, transform_indices = @transform_1, window_bounds = array<i64: 64, 16>}, {pipeline_mode = #tpu.pipeline_mode<synchronous>, transform_indices = @transform_2, window_bounds = array<i64: 64, 1>}, {pipeline_mode = #tpu.pipeline_mode<synchronous>, transform_indices = @transform_3, window_bounds = array<i64: 32, 64>}, {pipeline_mode = #tpu.pipeline_mode<synchronous>, transform_indices = @transform_4, window_bounds = array<i64: 32, 1>}, {pipeline_mode = #tpu.pipeline_mode<synchronous>, transform_indices = @transform_5, window_bounds = array<i64: 1, 32>}, {transform_indices = @transform_6, window_bounds = array<i64: 1, 1>}, {transform_indices = @transform_7, window_bounds = array<i64: 1, 8>}]} {
    %c0 = arith.constant 0 : index
    %c0_0 = arith.constant 0 : index
    %0 = vector.load %arg2[%c0, %c0_0] : memref<64x16xf32, #tpu.memory_space<vmem>>, vector<64x16xf32>
    %c0_1 = arith.constant 0 : index
    %c0_2 = arith.constant 0 : index
    %1 = vector.load %arg1[%c0_1, %c0_2] : memref<8x16xf32, #tpu.memory_space<vmem>>, vector<8x16xf32>
    %cst = arith.constant dense<0.000000e+00> : vector<64x8xf32>
    %2 = tpu.matmul %0, %1, %cst {dimension_numbers = #tpu.dot_dimension_numbers<[1], [1], [0], [0], [0, 0, 1, 0], [], []>} : vector<64x16xf32>, vector<8x16xf32>, vector<64x8xf32> -> vector<64x8xf32>
    %c0_3 = arith.constant 0 : index
    %c0_4 = arith.constant 0 : index
    %3 = vector.load %arg3[%c0_3, %c0_4] : memref<64x1xf32, #tpu.memory_space<vmem>>, vector<64x1xf32>
    %4 = vector.broadcast %3 : vector<64x1xf32> to vector<64x8xf32>
    %5 = arith.addf %2, %4 : vector<64x8xf32>
    %cst_5 = arith.constant 0.000000e+00 : f32
    %6 = vector.broadcast %cst_5 : f32 to vector<64x8xf32>
    %7 = arith.maximumf %5, %6 : vector<64x8xf32>
    %c0_6 = arith.constant 0 : index
    %c0_7 = arith.constant 0 : index
    %8 = vector.load %arg4[%c0_6, %c0_7] : memref<32x64xf32, #tpu.memory_space<vmem>>, vector<32x64xf32>
    %cst_8 = arith.constant dense<0.000000e+00> : vector<32x8xf32>
    %9 = tpu.matmul %8, %7, %cst_8 {dimension_numbers = #tpu.dot_dimension_numbers<[1], [0], [0], [1], [0, 0, 1, 1], [], []>} : vector<32x64xf32>, vector<64x8xf32>, vector<32x8xf32> -> vector<32x8xf32>
    %c0_9 = arith.constant 0 : index
    %c0_10 = arith.constant 0 : index
    %10 = vector.load %arg5[%c0_9, %c0_10] : memref<32x1xf32, #tpu.memory_space<vmem>>, vector<32x1xf32>
    %11 = vector.broadcast %10 : vector<32x1xf32> to vector<32x8xf32>
    %12 = arith.addf %9, %11 : vector<32x8xf32>
    %cst_11 = arith.constant 0.000000e+00 : f32
    %13 = vector.broadcast %cst_11 : f32 to vector<32x8xf32>
    %14 = arith.maximumf %12, %13 : vector<32x8xf32>
    %c0_12 = arith.constant 0 : index
    %c0_13 = arith.constant 0 : index
    %15 = vector.load %arg6[%c0_12, %c0_13] : memref<1x32xf32, #tpu.memory_space<vmem>>, vector<1x32xf32>
    %cst_14 = arith.constant dense<0.000000e+00> : vector<1x8xf32>
    %16 = tpu.matmul %15, %14, %cst_14 {dimension_numbers = #tpu.dot_dimension_numbers<[1], [0], [0], [1], [0, 0, 1, 1], [], []>} : vector<1x32xf32>, vector<32x8xf32>, vector<1x8xf32> -> vector<1x8xf32>
    %c0_15 = arith.constant 0 : index
    %c0_16 = arith.constant 0 : index
    %17 = memref.load %arg7[%c0_15, %c0_16] : memref<1x1xf32, #tpu.memory_space<smem>>
    %18 = vector.broadcast %17 : f32 to vector<1x8xf32>
    %19 = arith.addf %16, %18 : vector<1x8xf32>
    %c0_17 = arith.constant 0 : index
    %c0_18 = arith.constant 0 : index
    %20 = vector.load %arg8[%c0_17, %c0_18] : memref<1x8xf32, #tpu.memory_space<vmem>>, vector<1x8xf32>
    tpu.vector_store %arg8[%c0_17, %c0_18], %19 {strides = array<i32>} : memref<1x8xf32, #tpu.memory_space<vmem>>, vector<1x8xf32>,
    return
  }
  func.func @transform_0(%arg0: i32) -> (i32, i32) {
    %c0_i32 = arith.constant 0 : i32
    %c0_i32_0 = arith.constant 0 : i32
    return %arg0, %c0_i32 : i32, i32
  }
  func.func @transform_1(%arg0: i32) -> (i32, i32) {
    %c0_i32 = arith.constant 0 : i32
    %c0_i32_0 = arith.constant 0 : i32
    %c0_i32_1 = arith.constant 0 : i32
    return %c0_i32, %c0_i32_0 : i32, i32
  }
  func.func @transform_2(%arg0: i32) -> (i32, i32) {
    %c0_i32 = arith.constant 0 : i32
    %c0_i32_0 = arith.constant 0 : i32
    %c0_i32_1 = arith.constant 0 : i32
    return %c0_i32, %c0_i32_0 : i32, i32
  }
  func.func @transform_3(%arg0: i32) -> (i32, i32) {
    %c0_i32 = arith.constant 0 : i32
    %c0_i32_0 = arith.constant 0 : i32
    %c0_i32_1 = arith.constant 0 : i32
    return %c0_i32, %c0_i32_0 : i32, i32
  }
  func.func @transform_4(%arg0: i32) -> (i32, i32) {
    %c0_i32 = arith.constant 0 : i32
    %c0_i32_0 = arith.constant 0 : i32
    %c0_i32_1 = arith.constant 0 : i32
    return %c0_i32, %c0_i32_0 : i32, i32
  }
  func.func @transform_5(%arg0: i32) -> (i32, i32) {
    %c0_i32 = arith.constant 0 : i32
    %c0_i32_0 = arith.constant 0 : i32
    %c0_i32_1 = arith.constant 0 : i32
    return %c0_i32, %c0_i32_0 : i32, i32
  }
  func.func @transform_6(%arg0: i32) -> (i32, i32) {
    %c0_i32 = arith.constant 0 : i32
    %c0_i32_0 = arith.constant 0 : i32
    %c0_i32_1 = arith.constant 0 : i32
    return %c0_i32, %c0_i32_0 : i32, i32
  }
  func.func @transform_7(%arg0: i32) -> (i32, i32) {
    %c0_i32 = arith.constant 0 : i32
    %c0_i32_0 = arith.constant 0 : i32
    return %c0_i32, %arg0 : i32, i32
  }
}

</mosaic_0001>

<llo_original>
// kernel: small_mlp_forward.1
$region0: #{small_mlp_forward.1}
  #allocation0 [shape = 'u32[]', space=smem, size = 0x4, offset = 0x4, fixed_abs, tag = 'smem constant byte address 0x4 - core index']
  #allocation1 [shape = 'u32[72,128]{1,0:T(1,128)}', space=vmem, size = 0x9000, scoped, tag = 'internal scratch']
  #allocation2 [shape = 'f32[1,1]{1,0:T(1,128)S(6)}', space=smem, size = 0x200, scoped, tag = 'scoped memory for small_mlp_forward.1']
  %s0 = inlined_call_operand.vmem [shape: f32[8,16], index: 0, kind: input, shape index: {}]
  %s1 = inlined_call_operand.vmem [shape: f32[64,16], index: 1, kind: input, shape index: {}]
  %s2 = inlined_call_operand.vmem [shape: f32[64,1], index: 2, kind: input, shape index: {}]
  %s3 = inlined_call_operand.vmem [shape: f32[32,64], index: 3, kind: input, shape index: {}]
  %s4 = inlined_call_operand.vmem [shape: f32[32,1], index: 4, kind: input, shape index: {}]
  %s5 = inlined_call_operand.vmem [shape: f32[1,32], index: 5, kind: input, shape index: {}]
  %s6 = inlined_call_operand.<no memory space> [shape: f32[1,1], index: 6, kind: input, shape index: {}]
  %s7 = inlined_call_operand.hbm [shape: f32[1,8], index: 7, kind: output, shape index: {}]
  %s8 = sld [smem:[#allocation0]]
  $region38: #{small_mlp_forward.1} parent=0
    _
  %s10 = ssub.s32 1, %s8
  %s11 = scalar_select 0, %s10, %s8
  %12 = sst [smem:[#allocation2]] %s6
  $region1: #{small_mlp_forward.1} parent=0
    #allocation3 [shape = 'u8[512]{0}', space=vmem, size = 0x400, scoped, tag = 'output window, operand 0, single buffered']
    #allocation4 [shape = 's32[1]{0}', space=sflag, size = 0x4, scoped, tag = 'scoped memory for small_mlp_forward.1']
    %13 = vsyncpa [#allocation4], 0
    // Predicated region
    $region2: #{small_mlp_forward.1} parent=1 // pred_check
      _
    $region3: #{small_mlp_forward.1} parent=1 // pred_check_branch
      %15 = sbr.rel (0) target = $region5
    $region4: #{small_mlp_forward.1} parent=1 // pred_region
      _
    $region5: #{small_mlp_forward.1} parent=1 // pred_fallthru
      _
    // Predicated region
    $region6: #{small_mlp_forward.1} parent=1 // pred_check
      _
    $region7: #{small_mlp_forward.1} parent=1 // pred_check_branch
      %17 = sbr.rel (0) target = $region9
    $region8: #{small_mlp_forward.1} parent=1 // pred_region
      _
    $region9: #{small_mlp_forward.1} parent=1 // pred_fallthru
      _
    // Predicated region
    $region10: #{small_mlp_forward.1} parent=1 // pred_check
      _
    $region11: #{small_mlp_forward.1} parent=1 // pred_check_branch
      %19 = sbr.rel (0) target = $region13
    $region12: #{small_mlp_forward.1} parent=1 // pred_region
      _
    $region13: #{small_mlp_forward.1} parent=1 // pred_fallthru
      _
    // Predicated region
    $region14: #{small_mlp_forward.1} parent=1 // pred_check
      _
    $region15: #{small_mlp_forward.1} parent=1 // pred_check_branch
      %21 = sbr.rel (0) target = $region17
    $region16: #{small_mlp_forward.1} parent=1 // pred_region
      _
    $region17: #{small_mlp_forward.1} parent=1 // pred_fallthru
      _
    // Predicated region
    $region18: #{small_mlp_forward.1} parent=1 // pred_check
      _
    $region19: #{small_mlp_forward.1} parent=1 // pred_check_branch
      %23 = sbr.rel (0) target = $region21
    $region20: #{small_mlp_forward.1} parent=1 // pred_region
      _
    $region21: #{small_mlp_forward.1} parent=1 // pred_fallthru
      _
    // Predicated region
    $region22: #{small_mlp_forward.1} parent=1 // pred_check
      _
    $region23: #{small_mlp_forward.1} parent=1 // pred_check_branch
      %25 = sbr.rel (0) target = $region25
    $region24: #{small_mlp_forward.1} parent=1 // pred_region
      _
    $region25: #{small_mlp_forward.1} parent=1 // pred_fallthru
      _
    // Predicated region
    $region26: #{small_mlp_forward.1} parent=1 // pred_check
      _
    $region27: #{small_mlp_forward.1} parent=1 // pred_check_branch
      %27 = sbr.rel (0) target = $region29
    $region28: #{small_mlp_forward.1} parent=1 // pred_region
      _
    $region29: #{small_mlp_forward.1} parent=1 // pred_fallthru
      _
    %v28 = vld [vmem:[%s1] sm:$0xff]
    %v29 = vld [vmem:[%s1 + $0x8] sm:$0xff]
    %v30 = vld [vmem:[%s1 + $0x10] sm:$0xff]
    %v31 = vld [vmem:[%s1 + $0x18] sm:$0xff]
    %v32 = vld [vmem:[%s1 + $0x20] sm:$0xff]
    %v33 = vld [vmem:[%s1 + $0x28] sm:$0xff]
    %v34 = vld [vmem:[%s1 + $0x30] sm:$0xff]
    %v35 = vld [vmem:[%s1 + $0x38] sm:$0xff]
    %v36 = vld [vmem:[%s0] sm:$0xff]
    %v37 = vld [vmem:[%s2] sm:$0xff]
    %v38 = vld [vmem:[%s2 + $0x8] sm:$0xff]
    %v39 = vld [vmem:[%s2 + $0x10] sm:$0xff]
    %v40 = vld [vmem:[%s2 + $0x18] sm:$0xff]
    %v41 = vld [vmem:[%s2 + $0x20] sm:$0xff]
    %v42 = vld [vmem:[%s2 + $0x28] sm:$0xff]
    %v43 = vld [vmem:[%s2 + $0x30] sm:$0xff]
    %v44 = vld [vmem:[%s2 + $0x38] sm:$0xff]
    %46 = vset.pattern.permute.xlu0 0
    %47 = vperm.xlu0 %46, %v37
    %v48 = vpop.permute.xlu0 %47
    %51 = vset.pattern.permute.xlu0 0
    %52 = vperm.xlu0 %51, %v38
    %v53 = vpop.permute.xlu0 %52
    %56 = vset.pattern.permute.xlu0 0
    %57 = vperm.xlu0 %56, %v39
    %v58 = vpop.permute.xlu0 %57
    %61 = vset.pattern.permute.xlu0 0
    %62 = vperm.xlu0 %61, %v40
    %v63 = vpop.permute.xlu0 %62
    %66 = vset.pattern.permute.xlu0 0
    %67 = vperm.xlu0 %66, %v41
    %v68 = vpop.permute.xlu0 %67
    %71 = vset.pattern.permute.xlu0 0
    %72 = vperm.xlu0 %71, %v42
    %v73 = vpop.permute.xlu0 %72
    %76 = vset.pattern.permute.xlu0 0
    %77 = vperm.xlu0 %76, %v43
    %v78 = vpop.permute.xlu0 %77
    %81 = vset.pattern.permute.xlu0 0
    %82 = vperm.xlu0 %81, %v44
    %v83 = vpop.permute.xlu0 %82
    %vm85 = vcmask 130048
    %v87 = vsel %vm85, %v28, 0
    %v90 = vsel %vm85, %v29, 0
    %v93 = vsel %vm85, %v30, 0
    %v96 = vsel %vm85, %v31, 0
    %v99 = vsel %vm85, %v32, 0
    %v102 = vsel %vm85, %v33, 0
    %v105 = vsel %vm85, %v34, 0
    %v108 = vsel %vm85, %v35, 0
    %v111 = vsel %vm85, %v36, 0
    %113 = vmatpush.xpose.msra.mxu0 0.0
    %114 = vmatpush.xpose.msra.mxu0 0.0
    %115 = vmatpush.xpose.msra.mxu0 0.0
    %116 = vmatpush.xpose.msra.mxu0 0.0
    %117 = vmatpush.xpose.msra.mxu0 0.0
    %118 = vmatpush.xpose.msra.mxu0 0.0
    %119 = vmatpush.xpose.msra.mxu0 0.0
    %120 = vmatpush.xpose.msra.mxu0 0.0
    %121 = vmatpush.xpose.msra.mxu0 0.0
    %122 = vmatpush.xpose.msra.mxu0 0.0
    %123 = vmatpush.xpose.msra.mxu0 0.0
    %124 = vmatpush.xpose.msra.mxu0 0.0
    %125 = vmatpush.xpose.msra.mxu0 0.0
    %126 = vmatpush.xpose.msra.mxu0 0.0
    %127 = vmatpush.xpose.msra.mxu0 0.0
    %128 = vmatpush.xpose.msra.mxu0 %v111
    %129 = vmatmul.f32.gmra.mxu0 %v87
    %v130 = vpop.f32.mrf.mxu0
    %v131 = vadd.f32 %v48, %v130
    %132 = vmatmul.f32.gmra.mxu0 %v90
    %v133 = vpop.f32.mrf.mxu0
    %v134 = vadd.f32 %v53, %v133
    %135 = vmatmul.f32.gmra.mxu0 %v93
    %v136 = vpop.f32.mrf.mxu0
    %v137 = vadd.f32 %v58, %v136
    %138 = vmatmul.f32.gmra.mxu0 %v96
    %v139 = vpop.f32.mrf.mxu0
    %v140 = vadd.f32 %v63, %v139
    %141 = vmatmul.f32.gmra.mxu0 %v99
    %v142 = vpop.f32.mrf.mxu0
    %v143 = vadd.f32 %v68, %v142
    %144 = vmatmul.f32.gmra.mxu0 %v102
    %v145 = vpop.f32.mrf.mxu0
    %v146 = vadd.f32 %v73, %v145
    %147 = vmatmul.f32.gmra.mxu0 %v105
    %v148 = vpop.f32.mrf.mxu0
    %v149 = vadd.f32 %v78, %v148
    %150 = vmatmul.f32.gmra.mxu0 %v108
    %v151 = vpop.f32.mrf.mxu0
    %v152 = vadd.f32 %v83, %v151
    %153 = vdwg.mxu0
    %v154 = vmax.f32 %v131, 0.0
    %v155 = vmax.f32 %v134, 0.0
    %v156 = vmax.f32 %v137, 0.0
    %v157 = vmax.f32 %v140, 0.0
    %v158 = vmax.f32 %v143, 0.0
    %v159 = vmax.f32 %v146, 0.0
    %v160 = vmax.f32 %v149, 0.0
    %v161 = vmax.f32 %v152, 0.0
    %v162 = vld [vmem:[%s3] sm:$0xff]
    %v163 = vld [vmem:[%s3 + $0x8] sm:$0xff]
    %v164 = vld [vmem:[%s3 + $0x10] sm:$0xff]
    %v165 = vld [vmem:[%s3 + $0x18] sm:$0xff]
    %v166 = vld [vmem:[%s4] sm:$0xff]
    %v167 = vld [vmem:[%s4 + $0x8] sm:$0xff]
    %v168 = vld [vmem:[%s4 + $0x10] sm:$0xff]
    %v169 = vld [vmem:[%s4 + $0x18] sm:$0xff]
    %171 = vset.pattern.permute.xlu0 0
    %172 = vperm.xlu0 %171, %v166
    %v173 = vpop.permute.xlu0 %172
    %176 = vset.pattern.permute.xlu0 0
    %177 = vperm.xlu0 %176, %v167
    %v178 = vpop.permute.xlu0 %177
    %181 = vset.pattern.permute.xlu0 0
    %182 = vperm.xlu0 %181, %v168
    %v183 = vpop.permute.xlu0 %182
    %186 = vset.pattern.permute.xlu0 0
    %187 = vperm.xlu0 %186, %v169
    %v188 = vpop.permute.xlu0 %187
    %vm190 = vcmask 523264
    %v192 = vsel %vm190, %v162, 0
    %v195 = vsel %vm190, %v163, 0
    %v198 = vsel %vm190, %v164, 0
    %v201 = vsel %vm190, %v165, 0
    %203 = vmatpush.msra.mxu0 0.0
    %204 = vmatpush.msra.mxu0 0.0
    %205 = vmatpush.msra.mxu0 0.0
    %206 = vmatpush.msra.mxu0 0.0
    %207 = vmatpush.msra.mxu0 0.0
    %208 = vmatpush.msra.mxu0 0.0
    %209 = vmatpush.msra.mxu0 0.0
    %210 = vmatpush.msra.mxu0 0.0
    %211 = vmatpush.msra.mxu0 %v161
    %212 = vmatpush.msra.mxu0 %v160
    %213 = vmatpush.msra.mxu0 %v159
    %214 = vmatpush.msra.mxu0 %v158
    %215 = vmatpush.msra.mxu0 %v157
    %216 = vmatpush.msra.mxu0 %v156
    %217 = vmatpush.msra.mxu0 %v155
    %218 = vmatpush.msra.mxu0 %v154
    %219 = vmatmul.f32.gmra.mxu0 %v192
    %v220 = vpop.f32.mrf.mxu0
    %v221 = vadd.f32 %v173, %v220
    %222 = vmatmul.f32.gmra.mxu0 %v195
    %v223 = vpop.f32.mrf.mxu0
    %v224 = vadd.f32 %v178, %v223
    %225 = vmatmul.f32.gmra.mxu0 %v198
    %v226 = vpop.f32.mrf.mxu0
    %v227 = vadd.f32 %v183, %v226
    %228 = vmatmul.f32.gmra.mxu0 %v201
    %v229 = vpop.f32.mrf.mxu0
    %v230 = vadd.f32 %v188, %v229
    %231 = vdwg.mxu0
    %v232 = vmax.f32 %v221, 0.0
    %v233 = vmax.f32 %v224, 0.0
    %v234 = vmax.f32 %v227, 0.0
    %v235 = vmax.f32 %v230, 0.0
    %v236 = vld [vmem:[%s5] sm:$0x1]
    %s237 = sld [smem:[#allocation2]]
    %v238 = vstv %s237
    %vm239 = vcmask 261120
    %v241 = vsel %vm239, %v236, 0
    %243 = vmatpush.msra.mxu0 0.0
    %244 = vmatpush.msra.mxu0 0.0
    %245 = vmatpush.msra.mxu0 0.0
    %246 = vmatpush.msra.mxu0 0.0
    %247 = vmatpush.msra.mxu0 0.0
    %248 = vmatpush.msra.mxu0 0.0
    %249 = vmatpush.msra.mxu0 0.0
    %250 = vmatpush.msra.mxu0 0.0
    %251 = vmatpush.msra.mxu0 0.0
    %252 = vmatpush.msra.mxu0 0.0
    %253 = vmatpush.msra.mxu0 0.0
    %254 = vmatpush.msra.mxu0 0.0
    %255 = vmatpush.msra.mxu0 %v235
    %256 = vmatpush.msra.mxu0 %v234
    %257 = vmatpush.msra.mxu0 %v233
    %258 = vmatpush.msra.mxu0 %v232
    %259 = vmatmul.f32.gmra.mxu0 %v241
    %v260 = vpop.f32.mrf.mxu0
    %v261 = vadd.f32 %v238, %v260
    %262 = vdwg.mxu0
    %vm263 = vcmask 57344
    %264 = vst.msk [vmem:[#allocation3] sm:$0x1] %vm263, %v261
    // Predicated region
    $region30: #{small_mlp_forward.1} parent=1 // pred_check
      _
    $region31: #{small_mlp_forward.1} parent=1 // pred_check_branch
      %266 = sbr.rel (0) target = $region33
    $region32: #{small_mlp_forward.1} parent=1 // pred_region
      %268 = vsyncadd [#allocation4], 0
      %s270 = sshll.u32 [#allocation3], 4
      %s271 = int_to_ptr.vmem [resolvable:$true] %s270
      %s272 = sshll.u32 %s7, 4
      %s273 = int_to_ptr.hbm [resolvable:$true] %s272
      %275 = dma.vmem_to_hbm [thread:$0]  %s271, 16, %s273, [#allocation4]
    $region33: #{small_mlp_forward.1} parent=1 // pred_fallthru
      _
    // Predicated region
    $region34: #{small_mlp_forward.1} parent=1 // pred_check
      _
    $region35: #{small_mlp_forward.1} parent=1 // pred_check_branch
      %277 = sbr.rel (0) target = $region37
    $region36: #{small_mlp_forward.1} parent=1 // pred_region
      %279 = dma.done [#allocation4], 16
    $region37: #{small_mlp_forward.1} parent=1 // pred_fallthru
      _
    %280 = vsyncpa [#allocation4], 1

</llo_original>
